<compile_context>
chip_gen: v5e
topology: v5e:2x2
jax: 0.10.0
libtpu: 0.0.40
codegen_flags: <defaults>
</compile_context>

<pallas_src>
import jax
import jax.numpy as jnp
from jax.experimental import pallas as pl
from jax.experimental.pallas import tpu as pltpu

SUBLANE = 8
LANE = 128


def rnn_kernel(x_ref, wih_ref, whh_ref, b_ref, wfc_ref, bfc_ref,
               out_ref, xp_scr):
    """x_ref: (T*8, I_pad) time-major, batch padded to 8; weights pre-transposed.

    out_ref: (8, O_pad) f32 (rows >= B and lanes >= O are padding).
    xp_scr : (T*8, H) f32 scratch holding x @ W_ih.T + (b_ih + b_hh).
    """
    TB, H = xp_scr.shape
    B_pad = out_ref.shape[0]                 # == 8
    T = TB // B_pad

    # (1) Batched input projection for ALL timesteps in one MXU matmul,
    #     pulled off the serial recurrence chain.  f32 accumulation; the
    #     folded bias (b_ih + b_hh) broadcasts over all T*8 rows.
    xp_scr[...] = (
        jnp.dot(x_ref[...], wih_ref[...], preferred_element_type=jnp.float32)
        + b_ref[...]
    )

    # (2) Serial tanh recurrence; only h @ W_hh.T remains per step.
    #     h is carried in the MXU operand dtype (bf16 on the default path);
    #     the cast happens once, right after tanh.
    def step(t, h_prev):
        start = pl.multiple_of(t * SUBLANE, SUBLANE)     # 8-sublane aligned
        x_t = xp_scr[pl.ds(start, SUBLANE), :]            # (8, H) f32, plain vld
        hh = jnp.dot(h_prev, whh_ref[...],
                     preferred_element_type=jnp.float32)  # (8, H) f32 acc
        h_new = jnp.tanh(x_t + hh)                        # f32 elementwise
        return h_new.astype(whh_ref.dtype)                # single cast per step

    h0 = jnp.zeros((B_pad, H), whh_ref.dtype)
    h_T = jax.lax.fori_loop(0, T, step, h0, unroll=True)

    # (3) fc on the last hidden state only (== fc(out[:, -1, :]) in PyTorch).
    logits = (jnp.dot(h_T, wfc_ref[...], preferred_element_type=jnp.float32)
              + bfc_ref[...])
    out_ref[...] = logits.astype(out_ref.dtype)           # lane-dense vst


def pack_rnn_params(w_ih, w_hh, b_ih, b_hh, w_fc, b_fc,
                    *, mxu_dtype=jnp.bfloat16):
    """One-time parameter packing (hoisted out of the forward hot path)."""
    H, I = w_ih.shape
    O = w_fc.shape[0]
    I_pad = ((I + LANE - 1) // LANE) * LANE
    O_pad = ((O + LANE - 1) // LANE) * LANE

    wih_p = jnp.zeros((I_pad, H), mxu_dtype).at[:I, :].set(
        w_ih.T.astype(mxu_dtype))                          # (I_pad, H)
    whh_t = w_hh.T.astype(mxu_dtype)                       # (H, H)
    b_all = (b_ih + b_hh).reshape(1, H).astype(jnp.float32)
    wfc_p = jnp.zeros((H, O_pad), mxu_dtype).at[:, :O].set(
        w_fc.T.astype(mxu_dtype))                          # (H, O_pad)
    bfc_p = jnp.zeros((1, O_pad), jnp.float32).at[:, :O].set(
        b_fc.astype(jnp.float32))

    meta = dict(I=I, H=H, O=O, I_pad=I_pad, O_pad=O_pad, mxu_dtype=mxu_dtype)
    return (wih_p, whh_t, b_all, wfc_p, bfc_p), meta


def rnn_model_forward(x_btf, packed, meta):
    """x_btf: (B, T, I) batch-first like PyTorch.  Returns (B, output_size)."""
    B, T, I = x_btf.shape
    I_pad, O, O_pad = meta["I_pad"], meta["O"], meta["O_pad"]
    H = meta["H"]
    mxu_dtype = meta["mxu_dtype"]
    B_pad = SUBLANE                                       # batch padded to 8

    # Time-major, batch+feature zero-padded, flattened to (T*8, I_pad).
    x_tb = jnp.transpose(x_btf, (1, 0, 2))                # (T, B, I)
    x_tb = jnp.pad(x_tb, ((0, 0), (0, B_pad - B), (0, I_pad - I)))
    x2d = x_tb.reshape(T * B_pad, I_pad).astype(mxu_dtype)

    wih_p, whh_t, b_all, wfc_p, bfc_p = packed

    vmem = pltpu.MemorySpace.VMEM
    out_pad = pl.pallas_call(
        rnn_kernel,
        out_shape=jax.ShapeDtypeStruct((B_pad, O_pad), jnp.float32),
        in_specs=[pl.BlockSpec(memory_space=vmem) for _ in range(6)],
        out_specs=pl.BlockSpec(memory_space=vmem),
        scratch_shapes=[pltpu.VMEM((T * B_pad, H), jnp.float32)],
        compiler_params=pltpu.CompilerParams(
            # Explicit limit (v7x: 64 MiB physical / 32 MiB default scoped).
            vmem_limit_bytes=32 * 1024 * 1024),
    )(x2d, wih_p, whh_t, b_all, wfc_p, bfc_p)

    return out_pad[:B, :O]


def rnn_model_reference(x_btf, w_ih, w_hh, b_ih, b_hh, w_fc, b_fc):
    """Pure-JAX reference mirroring torch.nn.RNN(tanh, batch_first) + Linear."""
    B, T, I = x_btf.shape
    H = w_hh.shape[0]

    def step(h, x_t):
        h = jnp.tanh(x_t @ w_ih.T + b_ih + h @ w_hh.T + b_hh)
        return h, None

    h0 = jnp.zeros((B, H), jnp.float32)
    h_T, _ = jax.lax.scan(step, h0, jnp.transpose(x_btf, (1, 0, 2)))
    return h_T @ w_fc.T + b_fc


if __name__ == "__main__":
    hidden_size = 128
    vocab_size = 45
    input_size = vocab_size
    output_size = vocab_size
    batch = 2
    seq = 8

    key = jax.random.PRNGKey(0)
    ks = jax.random.split(key, 7)
    bound = 1.0 / (hidden_size ** 0.5)

    # PyTorch-style uniform(-1/sqrt(H), 1/sqrt(H)) init, deterministic.
    w_ih = jax.random.uniform(ks[0], (hidden_size, input_size),
                              jnp.float32, -bound, bound)
    w_hh = jax.random.uniform(ks[1], (hidden_size, hidden_size),
                              jnp.float32, -bound, bound)
    b_ih = jax.random.uniform(ks[2], (hidden_size,), jnp.float32, -bound, bound)
    b_hh = jax.random.uniform(ks[3], (hidden_size,), jnp.float32, -bound, bound)
    w_fc = jax.random.uniform(ks[4], (output_size, hidden_size),
                              jnp.float32, -bound, bound)
    b_fc = jax.random.uniform(ks[5], (output_size,), jnp.float32, -bound, bound)

    x = jax.random.normal(ks[6], (batch, seq, input_size), jnp.float32)

    ref = rnn_model_reference(x, w_ih, w_hh, b_ih, b_hh, w_fc, b_fc)

    # f32-operand path: exact-numerics check.
    packed_f32, meta_f32 = pack_rnn_params(
        w_ih, w_hh, b_ih, b_hh, w_fc, b_fc, mxu_dtype=jnp.float32)
    out_f32 = jax.block_until_ready(
        rnn_model_forward(x, packed_f32, meta_f32))
    assert out_f32.shape == (batch, output_size)
    assert jnp.allclose(out_f32, ref, atol=1e-4, rtol=1e-4), \
        "f32 kernel mismatch vs reference"

    # Default bf16 MXU-operand path (all chips), f32 elementwise/accumulation:
    # loose check (error compounds through T recurrent matmuls; fine at T=8).
    packed_bf16, meta_bf16 = pack_rnn_params(
        w_ih, w_hh, b_ih, b_hh, w_fc, b_fc, mxu_dtype=jnp.bfloat16)
    out_bf16 = jax.block_until_ready(
        rnn_model_forward(x, packed_bf16, meta_bf16))
    assert jnp.allclose(out_bf16, ref, atol=3e-2, rtol=3e-2), \
        "bf16 kernel mismatch vs reference"

    print("KERNEL_OK")
</pallas_src>

<mosaic_0001>
module attributes {stable_mosaic.version = 11 : i64} {
  func.func @rnn_kernel(%arg0: memref<64x128xf32, #tpu.memory_space<vmem>>, %arg1: memref<128x128xf32, #tpu.memory_space<vmem>>, %arg2: memref<128x128xf32, #tpu.memory_space<vmem>>, %arg3: memref<1x128xf32, #tpu.memory_space<vmem>>, %arg4: memref<128x128xf32, #tpu.memory_space<vmem>>, %arg5: memref<1x128xf32, #tpu.memory_space<vmem>>, %arg6: memref<8x128xf32, #tpu.memory_space<vmem>>, %arg7: memref<64x128xf32, #tpu.memory_space<vmem>>) attributes {dimension_semantics = [], scalar_prefetch = 0 : i64, scratch_operands = 1 : i64, tpu.core_type = #tpu.core_type<tc>} {
    %c0 = arith.constant 0 : index
    %c0_0 = arith.constant 0 : index
    %0 = vector.load %arg0[%c0, %c0_0] : memref<64x128xf32, #tpu.memory_space<vmem>>, vector<64x128xf32>
    %c0_1 = arith.constant 0 : index
    %c0_2 = arith.constant 0 : index
    %1 = vector.load %arg1[%c0_1, %c0_2] : memref<128x128xf32, #tpu.memory_space<vmem>>, vector<128x128xf32>
    %cst = arith.constant dense<0.000000e+00> : vector<64x128xf32>
    %2 = tpu.matmul %0, %1, %cst {dimension_numbers = #tpu.dot_dimension_numbers<[1], [0], [0], [1], [0, 0, 1, 1], [], []>} : vector<64x128xf32>, vector<128x128xf32>, vector<64x128xf32> -> vector<64x128xf32>
    %c0_3 = arith.constant 0 : index
    %c0_4 = arith.constant 0 : index
    %3 = vector.load %arg3[%c0_3, %c0_4] : memref<1x128xf32, #tpu.memory_space<vmem>>, vector<1x128xf32>
    %4 = vector.broadcast %3 : vector<1x128xf32> to vector<64x128xf32>
    %5 = arith.addf %2, %4 : vector<64x128xf32>
    %c0_5 = arith.constant 0 : index
    %c0_6 = arith.constant 0 : index
    %6 = vector.load %arg7[%c0_5, %c0_6] : memref<64x128xf32, #tpu.memory_space<vmem>>, vector<64x128xf32>
    tpu.vector_store %arg7[%c0_5, %c0_6], %5 {strides = array<i32>} : memref<64x128xf32, #tpu.memory_space<vmem>>, vector<64x128xf32>,
    %cst_7 = arith.constant 0.000000e+00 : f32
    %7 = vector.broadcast %cst_7 : f32 to vector<8x128xf32>
    %c0_i32 = arith.constant 0 : i32
    %c8_i32 = arith.constant 8 : i32
    %8 = arith.muli %c0_i32, %c8_i32 : i32
    %9 = tpu.assume_multiple %8, 8 : i32
    %10 = arith.index_cast %9 : i32 to index
    %c0_8 = arith.constant 0 : index
    %11 = vector.load %arg7[%10, %c0_8] : memref<64x128xf32, #tpu.memory_space<vmem>>, vector<8x128xf32>
    %c0_9 = arith.constant 0 : index
    %c0_10 = arith.constant 0 : index
    %12 = vector.load %arg2[%c0_9, %c0_10] : memref<128x128xf32, #tpu.memory_space<vmem>>, vector<128x128xf32>
    %cst_11 = arith.constant dense<0.000000e+00> : vector<8x128xf32>
    %13 = tpu.matmul %7, %12, %cst_11 {dimension_numbers = #tpu.dot_dimension_numbers<[1], [0], [0], [1], [0, 0, 1, 1], [], []>} : vector<8x128xf32>, vector<128x128xf32>, vector<8x128xf32> -> vector<8x128xf32>
    %14 = arith.addf %11, %13 : vector<8x128xf32>
    %15 = math.tanh %14 : vector<8x128xf32>
    %c1_i32 = arith.constant 1 : i32
    %c8_i32_12 = arith.constant 8 : i32
    %16 = arith.muli %c1_i32, %c8_i32_12 : i32
    %17 = tpu.assume_multiple %16, 8 : i32
    %18 = arith.index_cast %17 : i32 to index
    %c0_13 = arith.constant 0 : index
    %19 = vector.load %arg7[%18, %c0_13] : memref<64x128xf32, #tpu.memory_space<vmem>>, vector<8x128xf32>
    %c0_14 = arith.constant 0 : index
    %c0_15 = arith.constant 0 : index
    %20 = vector.load %arg2[%c0_14, %c0_15] : memref<128x128xf32, #tpu.memory_space<vmem>>, vector<128x128xf32>
    %cst_16 = arith.constant dense<0.000000e+00> : vector<8x128xf32>
    %21 = tpu.matmul %15, %20, %cst_16 {dimension_numbers = #tpu.dot_dimension_numbers<[1], [0], [0], [1], [0, 0, 1, 1], [], []>} : vector<8x128xf32>, vector<128x128xf32>, vector<8x128xf32> -> vector<8x128xf32>
    %22 = arith.addf %19, %21 : vector<8x128xf32>
    %23 = math.tanh %22 : vector<8x128xf32>
    %c2_i32 = arith.constant 2 : i32
    %c8_i32_17 = arith.constant 8 : i32
    %24 = arith.muli %c2_i32, %c8_i32_17 : i32
    %25 = tpu.assume_multiple %24, 8 : i32
    %26 = arith.index_cast %25 : i32 to index
    %c0_18 = arith.constant 0 : index
    %27 = vector.load %arg7[%26, %c0_18] : memref<64x128xf32, #tpu.memory_space<vmem>>, vector<8x128xf32>
    %c0_19 = arith.constant 0 : index
    %c0_20 = arith.constant 0 : index
    %28 = vector.load %arg2[%c0_19, %c0_20] : memref<128x128xf32, #tpu.memory_space<vmem>>, vector<128x128xf32>
    %cst_21 = arith.constant dense<0.000000e+00> : vector<8x128xf32>
    %29 = tpu.matmul %23, %28, %cst_21 {dimension_numbers = #tpu.dot_dimension_numbers<[1], [0], [0], [1], [0, 0, 1, 1], [], []>} : vector<8x128xf32>, vector<128x128xf32>, vector<8x128xf32> -> vector<8x128xf32>
    %30 = arith.addf %27, %29 : vector<8x128xf32>
    %31 = math.tanh %30 : vector<8x128xf32>
    %c3_i32 = arith.constant 3 : i32
    %c8_i32_22 = arith.constant 8 : i32
    %32 = arith.muli %c3_i32, %c8_i32_22 : i32
    %33 = tpu.assume_multiple %32, 8 : i32
    %34 = arith.index_cast %33 : i32 to index
    %c0_23 = arith.constant 0 : index
    %35 = vector.load %arg7[%34, %c0_23] : memref<64x128xf32, #tpu.memory_space<vmem>>, vector<8x128xf32>
    %c0_24 = arith.constant 0 : index
    %c0_25 = arith.constant 0 : index
    %36 = vector.load %arg2[%c0_24, %c0_25] : memref<128x128xf32, #tpu.memory_space<vmem>>, vector<128x128xf32>
    %cst_26 = arith.constant dense<0.000000e+00> : vector<8x128xf32>
    %37 = tpu.matmul %31, %36, %cst_26 {dimension_numbers = #tpu.dot_dimension_numbers<[1], [0], [0], [1], [0, 0, 1, 1], [], []>} : vector<8x128xf32>, vector<128x128xf32>, vector<8x128xf32> -> vector<8x128xf32>
    %38 = arith.addf %35, %37 : vector<8x128xf32>
    %39 = math.tanh %38 : vector<8x128xf32>
    %c4_i32 = arith.constant 4 : i32
    %c8_i32_27 = arith.constant 8 : i32
    %40 = arith.muli %c4_i32, %c8_i32_27 : i32
    %41 = tpu.assume_multiple %40, 8 : i32
    %42 = arith.index_cast %41 : i32 to index
    %c0_28 = arith.constant 0 : index
    %43 = vector.load %arg7[%42, %c0_28] : memref<64x128xf32, #tpu.memory_space<vmem>>, vector<8x128xf32>
    %c0_29 = arith.constant 0 : index
    %c0_30 = arith.constant 0 : index
    %44 = vector.load %arg2[%c0_29, %c0_30] : memref<128x128xf32, #tpu.memory_space<vmem>>, vector<128x128xf32>
    %cst_31 = arith.constant dense<0.000000e+00> : vector<8x128xf32>
    %45 = tpu.matmul %39, %44, %cst_31 {dimension_numbers = #tpu.dot_dimension_numbers<[1], [0], [0], [1], [0, 0, 1, 1], [], []>} : vector<8x128xf32>, vector<128x128xf32>, vector<8x128xf32> -> vector<8x128xf32>
    %46 = arith.addf %43, %45 : vector<8x128xf32>
    %47 = math.tanh %46 : vector<8x128xf32>
    %c5_i32 = arith.constant 5 : i32
    %c8_i32_32 = arith.constant 8 : i32
    %48 = arith.muli %c5_i32, %c8_i32_32 : i32
    %49 = tpu.assume_multiple %48, 8 : i32
    %50 = arith.index_cast %49 : i32 to index
    %c0_33 = arith.constant 0 : index
    %51 = vector.load %arg7[%50, %c0_33] : memref<64x128xf32, #tpu.memory_space<vmem>>, vector<8x128xf32>
    %c0_34 = arith.constant 0 : index
    %c0_35 = arith.constant 0 : index
    %52 = vector.load %arg2[%c0_34, %c0_35] : memref<128x128xf32, #tpu.memory_space<vmem>>, vector<128x128xf32>
    %cst_36 = arith.constant dense<0.000000e+00> : vector<8x128xf32>
    %53 = tpu.matmul %47, %52, %cst_36 {dimension_numbers = #tpu.dot_dimension_numbers<[1], [0], [0], [1], [0, 0, 1, 1], [], []>} : vector<8x128xf32>, vector<128x128xf32>, vector<8x128xf32> -> vector<8x128xf32>
    %54 = arith.addf %51, %53 : vector<8x128xf32>
    %55 = math.tanh %54 : vector<8x128xf32>
    %c6_i32 = arith.constant 6 : i32
    %c8_i32_37 = arith.constant 8 : i32
    %56 = arith.muli %c6_i32, %c8_i32_37 : i32
    %57 = tpu.assume_multiple %56, 8 : i32
    %58 = arith.index_cast %57 : i32 to index
    %c0_38 = arith.constant 0 : index
    %59 = vector.load %arg7[%58, %c0_38] : memref<64x128xf32, #tpu.memory_space<vmem>>, vector<8x128xf32>
    %c0_39 = arith.constant 0 : index
    %c0_40 = arith.constant 0 : index
    %60 = vector.load %arg2[%c0_39, %c0_40] : memref<128x128xf32, #tpu.memory_space<vmem>>, vector<128x128xf32>
    %cst_41 = arith.constant dense<0.000000e+00> : vector<8x128xf32>
    %61 = tpu.matmul %55, %60, %cst_41 {dimension_numbers = #tpu.dot_dimension_numbers<[1], [0], [0], [1], [0, 0, 1, 1], [], []>} : vector<8x128xf32>, vector<128x128xf32>, vector<8x128xf32> -> vector<8x128xf32>
    %62 = arith.addf %59, %61 : vector<8x128xf32>
    %63 = math.tanh %62 : vector<8x128xf32>
    %c7_i32 = arith.constant 7 : i32
    %c8_i32_42 = arith.constant 8 : i32
    %64 = arith.muli %c7_i32, %c8_i32_42 : i32
    %65 = tpu.assume_multiple %64, 8 : i32
    %66 = arith.index_cast %65 : i32 to index
    %c0_43 = arith.constant 0 : index
    %67 = vector.load %arg7[%66, %c0_43] : memref<64x128xf32, #tpu.memory_space<vmem>>, vector<8x128xf32>
    %c0_44 = arith.constant 0 : index
    %c0_45 = arith.constant 0 : index
    %68 = vector.load %arg2[%c0_44, %c0_45] : memref<128x128xf32, #tpu.memory_space<vmem>>, vector<128x128xf32>
    %cst_46 = arith.constant dense<0.000000e+00> : vector<8x128xf32>
    %69 = tpu.matmul %63, %68, %cst_46 {dimension_numbers = #tpu.dot_dimension_numbers<[1], [0], [0], [1], [0, 0, 1, 1], [], []>} : vector<8x128xf32>, vector<128x128xf32>, vector<8x128xf32> -> vector<8x128xf32>
    %70 = arith.addf %67, %69 : vector<8x128xf32>
    %71 = math.tanh %70 : vector<8x128xf32>
    %c8_i32_47 = arith.constant 8 : i32
    %c0_48 = arith.constant 0 : index
    %c0_49 = arith.constant 0 : index
    %72 = vector.load %arg4[%c0_48, %c0_49] : memref<128x128xf32, #tpu.memory_space<vmem>>, vector<128x128xf32>
    %cst_50 = arith.constant dense<0.000000e+00> : vector<8x128xf32>
    %73 = tpu.matmul %71, %72, %cst_50 {dimension_numbers = #tpu.dot_dimension_numbers<[1], [0], [0], [1], [0, 0, 1, 1], [], []>} : vector<8x128xf32>, vector<128x128xf32>, vector<8x128xf32> -> vector<8x128xf32>
    %c0_51 = arith.constant 0 : index
    %c0_52 = arith.constant 0 : index
    %74 = vector.load %arg5[%c0_51, %c0_52] : memref<1x128xf32, #tpu.memory_space<vmem>>, vector<1x128xf32>
    %75 = vector.broadcast %74 : vector<1x128xf32> to vector<8x128xf32>
    %76 = arith.addf %73, %75 : vector<8x128xf32>
    %c0_53 = arith.constant 0 : index
    %c0_54 = arith.constant 0 : index
    %77 = vector.load %arg6[%c0_53, %c0_54] : memref<8x128xf32, #tpu.memory_space<vmem>>, vector<8x128xf32>
    tpu.vector_store %arg6[%c0_53, %c0_54], %76 {strides = array<i32>} : memref<8x128xf32, #tpu.memory_space<vmem>>, vector<8x128xf32>,
    return
  }
}

</mosaic_0001>

<llo_original>
// kernel: tpu_custom_call.1
$region0: #{tpu_custom_call.1}
  #allocation0 [shape = 'u32[]', space=smem, size = 0x4, offset = 0x4, fixed_abs, tag = 'smem constant byte address 0x4 - core index']
  #allocation1 [shape = 'u32[72,128]{1,0:T(1,128)}', space=vmem, size = 0x9000, scoped, tag = 'internal scratch']
  #allocation2 [shape = 'f32[64,128]{1,0:T(8,128)}', space=vmem, size = 0x8000, scoped, tag = 'scratch operand']
  %s0 = inlined_call_operand.hbm [shape: f32[64,128], index: 0, kind: input, shape index: {}]
  %s1 = inlined_call_operand.hbm [shape: f32[128,128], index: 1, kind: input, shape index: {}]
  %s2 = inlined_call_operand.hbm [shape: f32[128,128], index: 2, kind: input, shape index: {}]
  %s3 = inlined_call_operand.vmem [shape: f32[1,128], index: 3, kind: input, shape index: {}]
  %s4 = inlined_call_operand.hbm [shape: f32[128,128], index: 4, kind: input, shape index: {}]
  %s5 = inlined_call_operand.vmem [shape: f32[1,128], index: 5, kind: input, shape index: {}]
  %s6 = inlined_call_operand.hbm [shape: f32[8,128], index: 6, kind: output, shape index: {}]
  %s7 = sld [smem:[#allocation0]]
  $region50: #{tpu_custom_call.1} parent=0
    _
  %s9 = ssub.s32 1, %s7
  %s10 = scalar_select 0, %s9, %s7
  $region1: #{tpu_custom_call.1} parent=0
    #allocation3 [shape = 'u8[32768]{0}', space=vmem, size = 0x8000, scoped, tag = 'input window, operand 0, single buffered']
    #allocation4 [shape = 's32[1]{0}', space=sflag, size = 0x4, scoped, tag = 'scoped memory for tpu_custom_call.1']
    #allocation5 [shape = 's32[1]{0}', space=sflag, size = 0x4, scoped, tag = 'scoped memory for tpu_custom_call.1']
    #allocation6 [shape = 'u8[65536]{0}', space=vmem, size = 0x10000, scoped, tag = 'input window, operand 1, single buffered']
    #allocation7 [shape = 's32[1]{0}', space=sflag, size = 0x4, scoped, tag = 'scoped memory for tpu_custom_call.1']
    #allocation8 [shape = 'u8[65536]{0}', space=vmem, size = 0x10000, scoped, tag = 'input window, operand 2, single buffered']
    #allocation9 [shape = 'u8[65536]{0}', space=vmem, size = 0x10000, scoped, tag = 'input window, operand 4, single buffered']
    #allocation10 [shape = 's32[1]{0}', space=sflag, size = 0x4, scoped, tag = 'scoped memory for tpu_custom_call.1']
    #allocation11 [shape = 'u8[4096]{0}', space=vmem, size = 0x1000, scoped, tag = 'output window, operand 0, single buffered']
    %11 = vsyncpa [#allocation4], 0
    %12 = vsyncpa [#allocation7], 0
    %13 = vsyncpa [#allocation10], 0
    %14 = vsyncpa [#allocation5], 0
    // Predicated region
    $region2: #{tpu_custom_call.1} parent=1 // pred_check
      _
    $region3: #{tpu_custom_call.1} parent=1 // pred_check_branch
      %16 = sbr.rel (0) target = $region5
    $region4: #{tpu_custom_call.1} parent=1 // pred_region
      %18 = vsyncadd [#allocation4], 0
      %s19 = sshll.u32 %s0, 4
      %s20 = int_to_ptr.hbm [resolvable:$true] %s19
      %s21 = sshll.u32 [#allocation3], 4
      %s22 = int_to_ptr.vmem [resolvable:$true] %s21
      %27 = dma.hbm_to_vmem [thread:$0]  %s20, 1024, %s22, [#allocation4], 128, 128, 8
    $region5: #{tpu_custom_call.1} parent=1 // pred_fallthru
      _
    // Predicated region
    $region6: #{tpu_custom_call.1} parent=1 // pred_check
      _
    $region7: #{tpu_custom_call.1} parent=1 // pred_check_branch
      %29 = sbr.rel (0) target = $region9
    $region8: #{tpu_custom_call.1} parent=1 // pred_region
      %31 = vsyncadd [#allocation7], 0
      %s32 = sshll.u32 %s1, 4
      %s33 = int_to_ptr.hbm [resolvable:$true] %s32
      %s34 = sshll.u32 [#allocation6], 4
      %s35 = int_to_ptr.vmem [resolvable:$true] %s34
      %40 = dma.hbm_to_vmem [thread:$0]  %s33, 2048, %s35, [#allocation7], 128, 128, 8
    $region9: #{tpu_custom_call.1} parent=1 // pred_fallthru
      _
    // Predicated region
    $region10: #{tpu_custom_call.1} parent=1 // pred_check
      _
    $region11: #{tpu_custom_call.1} parent=1 // pred_check_branch
      %42 = sbr.rel (0) target = $region13
    $region12: #{tpu_custom_call.1} parent=1 // pred_region
      %44 = vsyncadd [#allocation7], 0
      %s45 = sshll.u32 %s2, 4
      %s46 = int_to_ptr.hbm [resolvable:$true] %s45
      %s47 = sshll.u32 [#allocation8], 4
      %s48 = int_to_ptr.vmem [resolvable:$true] %s47
      %53 = dma.hbm_to_vmem [thread:$0]  %s46, 2048, %s48, [#allocation7], 128, 128, 8
    $region13: #{tpu_custom_call.1} parent=1 // pred_fallthru
      _
    // Predicated region
    $region14: #{tpu_custom_call.1} parent=1 // pred_check
      _
    $region15: #{tpu_custom_call.1} parent=1 // pred_check_branch
      %55 = sbr.rel (0) target = $region17
    $region16: #{tpu_custom_call.1} parent=1 // pred_region
      _
    $region17: #{tpu_custom_call.1} parent=1 // pred_fallthru
      _
    // Predicated region
    $region18: #{tpu_custom_call.1} parent=1 // pred_check
      _
    $region19: #{tpu_custom_call.1} parent=1 // pred_check_branch
      %57 = sbr.rel (0) target = $region21
    $region20: #{tpu_custom_call.1} parent=1 // pred_region
      %59 = vsyncadd [#allocation10], 0
      %s60 = sshll.u32 %s4, 4
      %s61 = int_to_ptr.hbm [resolvable:$true] %s60
      %s62 = sshll.u32 [#allocation9], 4
      %s63 = int_to_ptr.vmem [resolvable:$true] %s62
      %68 = dma.hbm_to_vmem [thread:$0]  %s61, 2048, %s63, [#allocation10], 128, 128, 8
    $region21: #{tpu_custom_call.1} parent=1 // pred_fallthru
      _
    // Predicated region
    $region22: #{tpu_custom_call.1} parent=1 // pred_check
      _
    $region23: #{tpu_custom_call.1} parent=1 // pred_check_branch
      %70 = sbr.rel (0) target = $region25
    $region24: #{tpu_custom_call.1} parent=1 // pred_region
      _
    $region25: #{tpu_custom_call.1} parent=1 // pred_fallthru
      _
    // Predicated region
    $region26: #{tpu_custom_call.1} parent=1 // pred_check
      _
    $region27: #{tpu_custom_call.1} parent=1 // pred_check_branch
      %72 = sbr.rel (0) target = $region29
    $region28: #{tpu_custom_call.1} parent=1 // pred_region
      %74 = dma.done [#allocation4], 1024
    $region29: #{tpu_custom_call.1} parent=1 // pred_fallthru
      _
    // Predicated region
    $region30: #{tpu_custom_call.1} parent=1 // pred_check
      _
    $region31: #{tpu_custom_call.1} parent=1 // pred_check_branch
      %76 = sbr.rel (0) target = $region33
    $region32: #{tpu_custom_call.1} parent=1 // pred_region
      %78 = dma.done [#allocation7], 2048
    $region33: #{tpu_custom_call.1} parent=1 // pred_fallthru
      _
    // Predicated region
    $region34: #{tpu_custom_call.1} parent=1 // pred_check
      _
    $region35: #{tpu_custom_call.1} parent=1 // pred_check_branch
      %80 = sbr.rel (0) target = $region37
    $region36: #{tpu_custom_call.1} parent=1 // pred_region
      %82 = dma.done [#allocation7], 2048
    $region37: #{tpu_custom_call.1} parent=1 // pred_fallthru
      _
    // Predicated region
    $region38: #{tpu_custom_call.1} parent=1 // pred_check
      _
    $region39: #{tpu_custom_call.1} parent=1 // pred_check_branch
      %84 = sbr.rel (0) target = $region41
    $region40: #{tpu_custom_call.1} parent=1 // pred_region
      %86 = dma.done [#allocation10], 2048
    $region41: #{tpu_custom_call.1} parent=1 // pred_fallthru
      _
    %v87 = vld [vmem:[#allocation3] sm:$0xff]
    %v88 = vld [vmem:[#allocation3 + $0x8] sm:$0xff]
    %v89 = vld [vmem:[#allocation3 + $0x10] sm:$0xff]
    %v90 = vld [vmem:[#allocation3 + $0x18] sm:$0xff]
    %v91 = vld [vmem:[#allocation3 + $0x20] sm:$0xff]
    %v92 = vld [vmem:[#allocation3 + $0x28] sm:$0xff]
    %v93 = vld [vmem:[#allocation3 + $0x30] sm:$0xff]
    %v94 = vld [vmem:[#allocation3 + $0x38] sm:$0xff]
    %v95 = vld [vmem:[#allocation6] sm:$0xff]
    %v96 = vld [vmem:[#allocation6 + $0x8] sm:$0xff]
    %v97 = vld [vmem:[#allocation6 + $0x10] sm:$0xff]
    %v98 = vld [vmem:[#allocation6 + $0x18] sm:$0xff]
    %v99 = vld [vmem:[#allocation6 + $0x20] sm:$0xff]
    %v100 = vld [vmem:[#allocation6 + $0x28] sm:$0xff]
    %v101 = vld [vmem:[#allocation6 + $0x30] sm:$0xff]
    %v102 = vld [vmem:[#allocation6 + $0x38] sm:$0xff]
    %v103 = vld [vmem:[#allocation6 + $0x40] sm:$0xff]
    %v104 = vld [vmem:[#allocation6 + $0x48] sm:$0xff]
    %v105 = vld [vmem:[#allocation6 + $0x50] sm:$0xff]
    %v106 = vld [vmem:[#allocation6 + $0x58] sm:$0xff]
    %v107 = vld [vmem:[#allocation6 + $0x60] sm:$0xff]
    %v108 = vld [vmem:[#allocation6 + $0x68] sm:$0xff]
    %v109 = vld [vmem:[#allocation6 + $0x70] sm:$0xff]
    %v110 = vld [vmem:[#allocation6 + $0x78] sm:$0xff]
    %v111 = vld [vmem:[%s3] sm:$0x1]
    %v113 = vperm.slane %v111, 0
    %115 = vmatpush.msra.mxu0 %v110
    %116 = vmatpush.msra.mxu0 %v109
    %117 = vmatpush.msra.mxu0 %v108
    %118 = vmatpush.msra.mxu0 %v107
    %119 = vmatpush.msra.mxu0 %v106
    %120 = vmatpush.msra.mxu0 %v105
    %121 = vmatpush.msra.mxu0 %v104
    %122 = vmatpush.msra.mxu0 %v103
    %123 = vmatpush.msra.mxu0 %v102
    %124 = vmatpush.msra.mxu0 %v101
    %125 = vmatpush.msra.mxu0 %v100
    %126 = vmatpush.msra.mxu0 %v99
    %127 = vmatpush.msra.mxu0 %v98
    %128 = vmatpush.msra.mxu0 %v97
    %129 = vmatpush.msra.mxu0 %v96
    %130 = vmatpush.msra.mxu0 %v95
    %131 = vmatmul.f32.gmra.mxu0 %v87
    %v132 = vpop.f32.mrf.mxu0
    %v133 = vadd.f32 %v113, %v132
    %134 = vmatmul.f32.gmra.mxu0 %v88
    %v135 = vpop.f32.mrf.mxu0
    %v136 = vadd.f32 %v113, %v135
    %137 = vmatmul.f32.gmra.mxu0 %v89
    %v138 = vpop.f32.mrf.mxu0
    %v139 = vadd.f32 %v113, %v138
    %140 = vmatmul.f32.gmra.mxu0 %v90
    %v141 = vpop.f32.mrf.mxu0
    %v142 = vadd.f32 %v113, %v141
    %143 = vmatmul.f32.gmra.mxu0 %v91
    %v144 = vpop.f32.mrf.mxu0
    %v145 = vadd.f32 %v113, %v144
    %146 = vmatmul.f32.gmra.mxu0 %v92
    %v147 = vpop.f32.mrf.mxu0
    %v148 = vadd.f32 %v113, %v147
    %149 = vmatmul.f32.gmra.mxu0 %v93
    %v150 = vpop.f32.mrf.mxu0
    %v151 = vadd.f32 %v113, %v150
    %152 = vmatmul.f32.gmra.mxu0 %v94
    %v153 = vpop.f32.mrf.mxu0
    %v154 = vadd.f32 %v113, %v153
    %155 = vdwg.mxu0
    %156 = vst [vmem:[#allocation2] sm:$0xff] %v133
    %157 = vst [vmem:[#allocation2 + $0x8] sm:$0xff] %v136
    %158 = vst [vmem:[#allocation2 + $0x10] sm:$0xff] %v139
    %159 = vst [vmem:[#allocation2 + $0x18] sm:$0xff] %v142
    %160 = vst [vmem:[#allocation2 + $0x20] sm:$0xff] %v145
    %161 = vst [vmem:[#allocation2 + $0x28] sm:$0xff] %v148
    %162 = vst [vmem:[#allocation2 + $0x30] sm:$0xff] %v151
    %163 = vst [vmem:[#allocation2 + $0x38] sm:$0xff] %v154
    %v164 = vld [vmem:[#allocation2] sm:$0xff]
    %v165 = vld [vmem:[#allocation8] sm:$0xff]
    %v166 = vld [vmem:[#allocation8 + $0x8] sm:$0xff]
    %v167 = vld [vmem:[#allocation8 + $0x10] sm:$0xff]
    %v168 = vld [vmem:[#allocation8 + $0x18] sm:$0xff]
    %v169 = vld [vmem:[#allocation8 + $0x20] sm:$0xff]
    %v170 = vld [vmem:[#allocation8 + $0x28] sm:$0xff]
    %v171 = vld [vmem:[#allocation8 + $0x30] sm:$0xff]
    %v172 = vld [vmem:[#allocation8 + $0x38] sm:$0xff]
    %v173 = vld [vmem:[#allocation8 + $0x40] sm:$0xff]
    %v174 = vld [vmem:[#allocation8 + $0x48] sm:$0xff]
    %v175 = vld [vmem:[#allocation8 + $0x50] sm:$0xff]
    %v176 = vld [vmem:[#allocation8 + $0x58] sm:$0xff]
    %v177 = vld [vmem:[#allocation8 + $0x60] sm:$0xff]
    %v178 = vld [vmem:[#allocation8 + $0x68] sm:$0xff]
    %v179 = vld [vmem:[#allocation8 + $0x70] sm:$0xff]
    %v180 = vld [vmem:[#allocation8 + $0x78] sm:$0xff]
    %181 = vmatpush.msra.mxu0 %v180
    %182 = vmatpush.msra.mxu0 %v179
    %183 = vmatpush.msra.mxu0 %v178
    %184 = vmatpush.msra.mxu0 %v177
    %185 = vmatpush.msra.mxu0 %v176
    %186 = vmatpush.msra.mxu0 %v175
    %187 = vmatpush.msra.mxu0 %v174
    %188 = vmatpush.msra.mxu0 %v173
    %189 = vmatpush.msra.mxu0 %v172
    %190 = vmatpush.msra.mxu0 %v171
    %191 = vmatpush.msra.mxu0 %v170
    %192 = vmatpush.msra.mxu0 %v169
    %193 = vmatpush.msra.mxu0 %v168
    %194 = vmatpush.msra.mxu0 %v167
    %195 = vmatpush.msra.mxu0 %v166
    %196 = vmatpush.msra.mxu0 %v165
    %197 = vmatmul.f32.gmra.mxu0 0.0
    %v198 = vpop.f32.mrf.mxu0
    %v199 = vadd.f32 0.0, %v198
    %200 = vdwg.mxu0
    %v201 = vadd.f32 %v164, %v199
    %v202 = vtanh.pop %v201
    %s203 = scalar_lea.vmem [#allocation2], 8
    %v204 = vld [vmem:[%s203] sm:$0xff]
    %205 = vmatpush.msra.mxu0 %v180
    %206 = vmatpush.msra.mxu0 %v179
    %207 = vmatpush.msra.mxu0 %v178
    %208 = vmatpush.msra.mxu0 %v177
    %209 = vmatpush.msra.mxu0 %v176
    %210 = vmatpush.msra.mxu0 %v175
    %211 = vmatpush.msra.mxu0 %v174
    %212 = vmatpush.msra.mxu0 %v173
    %213 = vmatpush.msra.mxu0 %v172
    %214 = vmatpush.msra.mxu0 %v171
    %215 = vmatpush.msra.mxu0 %v170
    %216 = vmatpush.msra.mxu0 %v169
    %217 = vmatpush.msra.mxu0 %v168
    %218 = vmatpush.msra.mxu0 %v167
    %219 = vmatpush.msra.mxu0 %v166
    %220 = vmatpush.msra.mxu0 %v165
    %221 = vmatmul.f32.gmra.mxu0 %v202
    %v222 = vpop.f32.mrf.mxu0
    %v223 = vadd.f32 0.0, %v222
    %224 = vdwg.mxu0
    %v225 = vadd.f32 %v204, %v223
    %v226 = vtanh.pop %v225
    %s227 = scalar_lea.vmem [#allocation2], 16
    %v228 = vld [vmem:[%s227] sm:$0xff]
    %229 = vmatpush.msra.mxu0 %v180
    %230 = vmatpush.msra.mxu0 %v179
    %231 = vmatpush.msra.mxu0 %v178
    %232 = vmatpush.msra.mxu0 %v177
    %233 = vmatpush.msra.mxu0 %v176
    %234 = vmatpush.msra.mxu0 %v175
    %235 = vmatpush.msra.mxu0 %v174
    %236 = vmatpush.msra.mxu0 %v173
    %237 = vmatpush.msra.mxu0 %v172
    %238 = vmatpush.msra.mxu0 %v171
    %239 = vmatpush.msra.mxu0 %v170
    %240 = vmatpush.msra.mxu0 %v169
    %241 = vmatpush.msra.mxu0 %v168
    %242 = vmatpush.msra.mxu0 %v167
    %243 = vmatpush.msra.mxu0 %v166
    %244 = vmatpush.msra.mxu0 %v165
    %245 = vmatmul.f32.gmra.mxu0 %v226
    %v246 = vpop.f32.mrf.mxu0
    %v247 = vadd.f32 0.0, %v246
    %248 = vdwg.mxu0
    %v249 = vadd.f32 %v228, %v247
    %v250 = vtanh.pop %v249
    %s251 = scalar_lea.vmem [#allocation2], 24
    %v252 = vld [vmem:[%s251] sm:$0xff]
    %253 = vmatpush.msra.mxu0 %v180
    %254 = vmatpush.msra.mxu0 %v179
    %255 = vmatpush.msra.mxu0 %v178
    %256 = vmatpush.msra.mxu0 %v177
    %257 = vmatpush.msra.mxu0 %v176
    %258 = vmatpush.msra.mxu0 %v175
    %259 = vmatpush.msra.mxu0 %v174
    %260 = vmatpush.msra.mxu0 %v173
    %261 = vmatpush.msra.mxu0 %v172
    %262 = vmatpush.msra.mxu0 %v171
    %263 = vmatpush.msra.mxu0 %v170
    %264 = vmatpush.msra.mxu0 %v169
    %265 = vmatpush.msra.mxu0 %v168
    %266 = vmatpush.msra.mxu0 %v167
    %267 = vmatpush.msra.mxu0 %v166
    %268 = vmatpush.msra.mxu0 %v165
    %269 = vmatmul.f32.gmra.mxu0 %v250
    %v270 = vpop.f32.mrf.mxu0
    %v271 = vadd.f32 0.0, %v270
    %272 = vdwg.mxu0
    %v273 = vadd.f32 %v252, %v271
    %v274 = vtanh.pop %v273
    %s275 = scalar_lea.vmem [#allocation2], 32
    %v276 = vld [vmem:[%s275] sm:$0xff]
    %277 = vmatpush.msra.mxu0 %v180
    %278 = vmatpush.msra.mxu0 %v179
    %279 = vmatpush.msra.mxu0 %v178
    %280 = vmatpush.msra.mxu0 %v177
    %281 = vmatpush.msra.mxu0 %v176
    %282 = vmatpush.msra.mxu0 %v175
    %283 = vmatpush.msra.mxu0 %v174
    %284 = vmatpush.msra.mxu0 %v173
    %285 = vmatpush.msra.mxu0 %v172
    %286 = vmatpush.msra.mxu0 %v171
    %287 = vmatpush.msra.mxu0 %v170
    %288 = vmatpush.msra.mxu0 %v169
    %289 = vmatpush.msra.mxu0 %v168
    %290 = vmatpush.msra.mxu0 %v167
    %291 = vmatpush.msra.mxu0 %v166
    %292 = vmatpush.msra.mxu0 %v165
    %293 = vmatmul.f32.gmra.mxu0 %v274
    %v294 = vpop.f32.mrf.mxu0
    %v295 = vadd.f32 0.0, %v294
    %296 = vdwg.mxu0
    %v297 = vadd.f32 %v276, %v295
    %v298 = vtanh.pop %v297
    %s299 = scalar_lea.vmem [#allocation2], 40
    %v300 = vld [vmem:[%s299] sm:$0xff]
    %301 = vmatpush.msra.mxu0 %v180
    %302 = vmatpush.msra.mxu0 %v179
    %303 = vmatpush.msra.mxu0 %v178
    %304 = vmatpush.msra.mxu0 %v177
    %305 = vmatpush.msra.mxu0 %v176
    %306 = vmatpush.msra.mxu0 %v175
    %307 = vmatpush.msra.mxu0 %v174
    %308 = vmatpush.msra.mxu0 %v173
    %309 = vmatpush.msra.mxu0 %v172
    %310 = vmatpush.msra.mxu0 %v171
    %311 = vmatpush.msra.mxu0 %v170
    %312 = vmatpush.msra.mxu0 %v169
    %313 = vmatpush.msra.mxu0 %v168
    %314 = vmatpush.msra.mxu0 %v167
    %315 = vmatpush.msra.mxu0 %v166
    %316 = vmatpush.msra.mxu0 %v165
    %317 = vmatmul.f32.gmra.mxu0 %v298
    %v318 = vpop.f32.mrf.mxu0
    %v319 = vadd.f32 0.0, %v318
    %320 = vdwg.mxu0
    %v321 = vadd.f32 %v300, %v319
    %v322 = vtanh.pop %v321
    %s323 = scalar_lea.vmem [#allocation2], 48
    %v324 = vld [vmem:[%s323] sm:$0xff]
    %325 = vmatpush.msra.mxu0 %v180
    %326 = vmatpush.msra.mxu0 %v179
    %327 = vmatpush.msra.mxu0 %v178
    %328 = vmatpush.msra.mxu0 %v177
    %329 = vmatpush.msra.mxu0 %v176
    %330 = vmatpush.msra.mxu0 %v175
    %331 = vmatpush.msra.mxu0 %v174
    %332 = vmatpush.msra.mxu0 %v173
    %333 = vmatpush.msra.mxu0 %v172
    %334 = vmatpush.msra.mxu0 %v171
    %335 = vmatpush.msra.mxu0 %v170
    %336 = vmatpush.msra.mxu0 %v169
    %337 = vmatpush.msra.mxu0 %v168
    %338 = vmatpush.msra.mxu0 %v167
    %339 = vmatpush.msra.mxu0 %v166
    %340 = vmatpush.msra.mxu0 %v165
    %341 = vmatmul.f32.gmra.mxu0 %v322
    %v342 = vpop.f32.mrf.mxu0
    %v343 = vadd.f32 0.0, %v342
    %344 = vdwg.mxu0
    %v345 = vadd.f32 %v324, %v343
    %v346 = vtanh.pop %v345
    %s347 = scalar_lea.vmem [#allocation2], 56
    %v348 = vld [vmem:[%s347] sm:$0xff]
    %349 = vmatpush.msra.mxu0 %v180
    %350 = vmatpush.msra.mxu0 %v179
    %351 = vmatpush.msra.mxu0 %v178
    %352 = vmatpush.msra.mxu0 %v177
    %353 = vmatpush.msra.mxu0 %v176
    %354 = vmatpush.msra.mxu0 %v175
    %355 = vmatpush.msra.mxu0 %v174
    %356 = vmatpush.msra.mxu0 %v173
    %357 = vmatpush.msra.mxu0 %v172
    %358 = vmatpush.msra.mxu0 %v171
    %359 = vmatpush.msra.mxu0 %v170
    %360 = vmatpush.msra.mxu0 %v169
    %361 = vmatpush.msra.mxu0 %v168
    %362 = vmatpush.msra.mxu0 %v167
    %363 = vmatpush.msra.mxu0 %v166
    %364 = vmatpush.msra.mxu0 %v165
    %365 = vmatmul.f32.gmra.mxu0 %v346
    %v366 = vpop.f32.mrf.mxu0
    %v367 = vadd.f32 0.0, %v366
    %368 = vdwg.mxu0
    %v369 = vadd.f32 %v348, %v367
    %v370 = vtanh.pop %v369
    %v371 = vld [vmem:[#allocation9] sm:$0xff]
    %v372 = vld [vmem:[#allocation9 + $0x8] sm:$0xff]
    %v373 = vld [vmem:[#allocation9 + $0x10] sm:$0xff]
    %v374 = vld [vmem:[#allocation9 + $0x18] sm:$0xff]
    %v375 = vld [vmem:[#allocation9 + $0x20] sm:$0xff]
    %v376 = vld [vmem:[#allocation9 + $0x28] sm:$0xff]
    %v377 = vld [vmem:[#allocation9 + $0x30] sm:$0xff]
    %v378 = vld [vmem:[#allocation9 + $0x38] sm:$0xff]
    %v379 = vld [vmem:[#allocation9 + $0x40] sm:$0xff]
    %v380 = vld [vmem:[#allocation9 + $0x48] sm:$0xff]
    %v381 = vld [vmem:[#allocation9 + $0x50] sm:$0xff]
    %v382 = vld [vmem:[#allocation9 + $0x58] sm:$0xff]
    %v383 = vld [vmem:[#allocation9 + $0x60] sm:$0xff]
    %v384 = vld [vmem:[#allocation9 + $0x68] sm:$0xff]
    %v385 = vld [vmem:[#allocation9 + $0x70] sm:$0xff]
    %v386 = vld [vmem:[#allocation9 + $0x78] sm:$0xff]
    %v387 = vld [vmem:[%s5] sm:$0x1]
    %v389 = vperm.slane %v387, 0
    %391 = vmatpush.msra.mxu0 %v386
    %392 = vmatpush.msra.mxu0 %v385
    %393 = vmatpush.msra.mxu0 %v384
    %394 = vmatpush.msra.mxu0 %v383
    %395 = vmatpush.msra.mxu0 %v382
    %396 = vmatpush.msra.mxu0 %v381
    %397 = vmatpush.msra.mxu0 %v380
    %398 = vmatpush.msra.mxu0 %v379
    %399 = vmatpush.msra.mxu0 %v378
    %400 = vmatpush.msra.mxu0 %v377
    %401 = vmatpush.msra.mxu0 %v376
    %402 = vmatpush.msra.mxu0 %v375
    %403 = vmatpush.msra.mxu0 %v374
    %404 = vmatpush.msra.mxu0 %v373
    %405 = vmatpush.msra.mxu0 %v372
    %406 = vmatpush.msra.mxu0 %v371
    %407 = vmatmul.f32.gmra.mxu0 %v370
    %v408 = vpop.f32.mrf.mxu0
    %v409 = vadd.f32 %v389, %v408
    %410 = vdwg.mxu0
    %411 = vst [vmem:[#allocation11] sm:$0xff] %v409
    // Predicated region
    $region42: #{tpu_custom_call.1} parent=1 // pred_check
      _
    $region43: #{tpu_custom_call.1} parent=1 // pred_check_branch
      %413 = sbr.rel (0) target = $region45
    $region44: #{tpu_custom_call.1} parent=1 // pred_region
      %415 = vsyncadd [#allocation5], 0
      %s417 = sshll.u32 [#allocation11], 4
      %s418 = int_to_ptr.vmem [resolvable:$true] %s417
      %s419 = sshll.u32 %s6, 4
      %s420 = int_to_ptr.hbm [resolvable:$true] %s419
      %422 = dma.vmem_to_hbm [thread:$0]  %s418, 128, %s420, [#allocation5]
    $region45: #{tpu_custom_call.1} parent=1 // pred_fallthru
      _
    // Predicated region
    $region46: #{tpu_custom_call.1} parent=1 // pred_check
      _
    $region47: #{tpu_custom_call.1} parent=1 // pred_check_branch
      %424 = sbr.rel (0) target = $region49
    $region48: #{tpu_custom_call.1} parent=1 // pred_region
      %426 = dma.done [#allocation5], 128
    $region49: #{tpu_custom_call.1} parent=1 // pred_fallthru
      _
    %427 = vsyncpa [#allocation4], 1
    %428 = vsyncpa [#allocation7], 1
    %429 = vsyncpa [#allocation10], 1
    %430 = vsyncpa [#allocation5], 1

</llo_original>
